<compile_context>
chip_gen: v7x
topology: tpu7x:2x2x1
jax: 0.10.0
libtpu: 0.0.40
codegen_flags: <defaults>
</compile_context>

<pallas_src>
import math

import jax
import jax.numpy as jnp
import numpy as np
from jax.experimental import pallas as pl
from jax.experimental.pallas import tpu as pltpu


def _round_up(a: int, b: int) -> int:
    return ((a + b - 1) // b) * b


def _make_kernel(g: int):
    """Kernel specialized on the (static) row-packing factor g."""

    def kernel(x_ref, m_ref, p_ref, o_ref):
        # x_ref: (tile_rows, g)    -- g original scalar values per packed row
        # m_ref: (g, tile_d)       -- block-diagonal duplicated frequencies
        # p_ref: (1, tile_d)       -- per-lane phase: 0 (sin lanes) / pi/2 (cos lanes)
        # o_ref: (tile_rows, tile_d)
        angle = x_ref[:, 0:1] * m_ref[0:1, :]
        for j in range(1, g):                       # static unroll, g <= 16
            angle = angle + x_ref[:, j:j + 1] * m_ref[j:j + 1, :]
        o_ref[...] = jnp.sin(angle + p_ref[...])

    return kernel


def numeric_value_encoding(x: jnp.ndarray, embedding_dim: int) -> jnp.ndarray:
    """x: (batch_size, seq_len) float32 with values in (0, 1).
    Returns (batch_size, seq_len, embedding_dim) float32."""
    assert embedding_dim >= 2 and embedding_dim % 2 == 0, "embedding_dim must be even"
    B, S = x.shape
    D = embedding_dim
    N = B * S

    # ---- frequency / phase constants (same arithmetic as the reference) ----
    mul_term = jnp.exp(
        jnp.arange(0, D, 2, dtype=jnp.float32) * (math.log(10000.0) / D)
    )                                              # (D//2,)
    mul_dup = jnp.repeat(mul_term, 2)              # (D,)  [m0, m0, m1, m1, ...]

    # ---- row packing factor: make the output lane dim a multiple of 128 ----
    lcm = D * 128 // math.gcd(D, 128)
    if D < 128 and lcm <= 1024 and lcm // D <= 16:
        g = lcm // D
    else:
        g = 1
    L = g * D

    # Block-diagonal frequency matrix (g, L): row j holds mul_dup in lanes
    # [j*D, (j+1)*D) and exact zeros elsewhere, so
    #   angle[r, j*D + d] = x[r*g + j] * mul_dup[d]
    # is a sum of outer-product broadcasts with no in-kernel shuffles.
    m_mat = jnp.zeros((g, L), dtype=jnp.float32)
    for j in range(g):
        m_mat = m_mat.at[j, j * D:(j + 1) * D].set(mul_dup)
    # Phase: 0 on even (sin) lanes, pi/2 on odd (cos) lanes; cos(a) == sin(a + pi/2).
    phase = jnp.tile(jnp.array([0.0, math.pi / 2.0], dtype=jnp.float32), L // 2)
    phase = phase.reshape(1, L)

    # ---- lane tiling (only needed for very wide D) ----
    if L % 128 == 0 and L > 1024:
        tile_d = next(c for c in (512, 256, 128) if L % c == 0)
    else:
        tile_d = L

    # ---- row tiling: big blocks (amortize ~0.35us/step), <= 2 MiB out block ----
    rows = _round_up(N, g) // g                    # packed rows actually needed
    r8 = _round_up(rows, 8)
    budget_rows = max(8, ((2 << 20) // (tile_d * 4)) // 8 * 8)
    tile_rows = min(1024, budget_rows, r8)
    rows_pad = _round_up(rows, tile_rows)
    n_pad = rows_pad * g

    x_flat = x.astype(jnp.float32).reshape(-1)
    if n_pad > N:
        x_flat = jnp.concatenate(
            [x_flat, jnp.zeros((n_pad - N,), dtype=jnp.float32)])
    x_packed = x_flat.reshape(rows_pad, g)

    grid = (rows_pad // tile_rows, L // tile_d)

    out = pl.pallas_call(
        _make_kernel(g),
        out_shape=jax.ShapeDtypeStruct((rows_pad, L), jnp.float32),
        grid=grid,
        in_specs=[
            pl.BlockSpec((tile_rows, g), lambda i, j: (i, 0)),   # packed values
            pl.BlockSpec((g, tile_d), lambda i, j: (0, j)),      # frequencies
            pl.BlockSpec((1, tile_d), lambda i, j: (0, j)),      # phase
        ],
        out_specs=pl.BlockSpec((tile_rows, tile_d), lambda i, j: (i, j)),
        compiler_params=pltpu.CompilerParams(
            dimension_semantics=("parallel", "parallel")),
    )(x_packed, m_mat, phase)

    enc = out.reshape(rows_pad * g, D)             # free row-major un-packing
    if n_pad > N:
        enc = enc[:N]
    return enc.reshape(B, S, D)


def _reference(x: jnp.ndarray, embedding_dim: int) -> jnp.ndarray:
    """Pure-JAX reference matching the PyTorch forward."""
    B, S = x.shape
    D = embedding_dim
    numeric_val = x[..., None].astype(jnp.float32)              # (B, S, 1)
    mul_term = jnp.exp(
        jnp.arange(0, D, 2, dtype=jnp.float32) * (math.log(10000.0) / D)
    )                                                           # (D//2,)
    sin_part = jnp.sin(numeric_val * mul_term)                  # (B, S, D//2)
    cos_part = jnp.cos(numeric_val * mul_term)                  # (B, S, D//2)
    out = jnp.zeros((B, S, D), dtype=jnp.float32)
    out = out.at[:, :, 0::2].set(sin_part)
    out = out.at[:, :, 1::2].set(cos_part)
    return out


if __name__ == "__main__":
    batch_size, seq_len, embedding_dim = 2, 8, 32

    key = jax.random.PRNGKey(0)
    x = jax.random.uniform(key, (batch_size, seq_len), dtype=jnp.float32)  # values in (0, 1)

    out = jax.block_until_ready(numeric_value_encoding(x, embedding_dim))
    ref = jax.block_until_ready(_reference(x, embedding_dim))

    assert out.shape == (batch_size, seq_len, embedding_dim)
    assert out.dtype == jnp.float32

    out_np, ref_np = np.asarray(out), np.asarray(ref)
    # sin lanes: same f32 angle as the reference; differences are limited to
    # implementation-level sin approximation deltas after range reduction.
    np.testing.assert_allclose(out_np[..., 0::2], ref_np[..., 0::2],
                               rtol=1e-4, atol=1e-3)
    # cos lanes: computed as sin(angle + pi/2); the single extra f32 rounding of
    # (angle + pi/2) is bounded by 0.5*ulp(angle) < 5e-4 for angles < 1e4.
    np.testing.assert_allclose(out_np[..., 1::2], ref_np[..., 1::2],
                               rtol=1e-4, atol=2e-3)

    # Also exercise the un-packed (D >= 128) path once.
    out2 = jax.block_until_ready(numeric_value_encoding(x, 128))
    ref2 = jax.block_until_ready(_reference(x, 128))
    out2_np, ref2_np = np.asarray(out2), np.asarray(ref2)
    np.testing.assert_allclose(out2_np[..., 0::2], ref2_np[..., 0::2],
                               rtol=1e-4, atol=1e-3)
    np.testing.assert_allclose(out2_np[..., 1::2], ref2_np[..., 1::2],
                               rtol=1e-4, atol=2e-3)

    print("KERNEL_OK")
</pallas_src>

<mosaic_0001>
module attributes {stable_mosaic.version = 11 : i64} {
  func.func @kernel(%arg0: i32, %arg1: i32, %arg2: memref<8x4xf32, #tpu.memory_space<vmem>>, %arg3: memref<4x128xf32, #tpu.memory_space<vmem>>, %arg4: memref<1x128xf32, #tpu.memory_space<vmem>>, %arg5: memref<8x128xf32, #tpu.memory_space<vmem>>) attributes {dimension_semantics = [#tpu.dimension_semantics<parallel>, #tpu.dimension_semantics<parallel>], iteration_bounds = array<i64: 1, 1>, scalar_prefetch = 0 : i64, scratch_operands = 0 : i64, tpu.core_type = #tpu.core_type<tc>, window_params = [{transform_indices = @transform_0, window_bounds = array<i64: 8, 4>}, {transform_indices = @transform_1, window_bounds = array<i64: 4, 128>}, {transform_indices = @transform_2, window_bounds = array<i64: 1, 128>}, {transform_indices = @transform_3, window_bounds = array<i64: 8, 128>}]} {
    %c0 = arith.constant 0 : index
    %c0_0 = arith.constant 0 : index
    %0 = vector.load %arg2[%c0, %c0_0] : memref<8x4xf32, #tpu.memory_space<vmem>>, vector<8x1xf32>
    %c0_1 = arith.constant 0 : index
    %c0_2 = arith.constant 0 : index
    %1 = vector.load %arg3[%c0_1, %c0_2] : memref<4x128xf32, #tpu.memory_space<vmem>>, vector<1x128xf32>
    %2 = vector.broadcast %0 : vector<8x1xf32> to vector<8x128xf32>
    %3 = vector.broadcast %1 : vector<1x128xf32> to vector<8x128xf32>
    %4 = arith.mulf %2, %3 : vector<8x128xf32>
    %c0_3 = arith.constant 0 : index
    %c1 = arith.constant 1 : index
    %5 = vector.load %arg2[%c0_3, %c1] : memref<8x4xf32, #tpu.memory_space<vmem>>, vector<8x1xf32>
    %c1_4 = arith.constant 1 : index
    %c0_5 = arith.constant 0 : index
    %6 = vector.load %arg3[%c1_4, %c0_5] : memref<4x128xf32, #tpu.memory_space<vmem>>, vector<1x128xf32>
    %7 = vector.broadcast %5 : vector<8x1xf32> to vector<8x128xf32>
    %8 = vector.broadcast %6 : vector<1x128xf32> to vector<8x128xf32>
    %9 = arith.mulf %7, %8 : vector<8x128xf32>
    %10 = arith.addf %4, %9 : vector<8x128xf32>
    %c0_6 = arith.constant 0 : index
    %c2 = arith.constant 2 : index
    %11 = vector.load %arg2[%c0_6, %c2] : memref<8x4xf32, #tpu.memory_space<vmem>>, vector<8x1xf32>
    %c2_7 = arith.constant 2 : index
    %c0_8 = arith.constant 0 : index
    %12 = vector.load %arg3[%c2_7, %c0_8] : memref<4x128xf32, #tpu.memory_space<vmem>>, vector<1x128xf32>
    %13 = vector.broadcast %11 : vector<8x1xf32> to vector<8x128xf32>
    %14 = vector.broadcast %12 : vector<1x128xf32> to vector<8x128xf32>
    %15 = arith.mulf %13, %14 : vector<8x128xf32>
    %16 = arith.addf %10, %15 : vector<8x128xf32>
    %c0_9 = arith.constant 0 : index
    %c3 = arith.constant 3 : index
    %17 = vector.load %arg2[%c0_9, %c3] : memref<8x4xf32, #tpu.memory_space<vmem>>, vector<8x1xf32>
    %c3_10 = arith.constant 3 : index
    %c0_11 = arith.constant 0 : index
    %18 = vector.load %arg3[%c3_10, %c0_11] : memref<4x128xf32, #tpu.memory_space<vmem>>, vector<1x128xf32>
    %19 = vector.broadcast %17 : vector<8x1xf32> to vector<8x128xf32>
    %20 = vector.broadcast %18 : vector<1x128xf32> to vector<8x128xf32>
    %21 = arith.mulf %19, %20 : vector<8x128xf32>
    %22 = arith.addf %16, %21 : vector<8x128xf32>
    %c0_12 = arith.constant 0 : index
    %c0_13 = arith.constant 0 : index
    %23 = vector.load %arg4[%c0_12, %c0_13] : memref<1x128xf32, #tpu.memory_space<vmem>>, vector<1x128xf32>
    %24 = vector.broadcast %23 : vector<1x128xf32> to vector<8x128xf32>
    %25 = arith.addf %22, %24 : vector<8x128xf32>
    %26 = math.sin %25 : vector<8x128xf32>
    %c0_14 = arith.constant 0 : index
    %c0_15 = arith.constant 0 : index
    %27 = vector.load %arg5[%c0_14, %c0_15] : memref<8x128xf32, #tpu.memory_space<vmem>>, vector<8x128xf32>
    tpu.vector_store %arg5[%c0_14, %c0_15], %26 {strides = array<i32>} : memref<8x128xf32, #tpu.memory_space<vmem>>, vector<8x128xf32>,
    return
  }
  func.func @transform_0(%arg0: i32, %arg1: i32) -> (i32, i32) {
    %c0_i32 = arith.constant 0 : i32
    %c0_i32_0 = arith.constant 0 : i32
    return %arg0, %c0_i32 : i32, i32
  }
  func.func @transform_1(%arg0: i32, %arg1: i32) -> (i32, i32) {
    %c0_i32 = arith.constant 0 : i32
    %c0_i32_0 = arith.constant 0 : i32
    return %c0_i32, %arg1 : i32, i32
  }
  func.func @transform_2(%arg0: i32, %arg1: i32) -> (i32, i32) {
    %c0_i32 = arith.constant 0 : i32
    %c0_i32_0 = arith.constant 0 : i32
    return %c0_i32, %arg1 : i32, i32
  }
  func.func @transform_3(%arg0: i32, %arg1: i32) -> (i32, i32) {
    %c0_i32 = arith.constant 0 : i32
    return %arg0, %arg1 : i32, i32
  }
}

</mosaic_0001>

<llo_original>
// kernel: tpu_custom_call.1
$region0: #{tpu_custom_call.1}
  #allocation0 [shape = 'u32[]', space=smem, size = 0x4, offset = 0x4, fixed_abs, tag = 'smem constant byte address 0x4 - core index']
  #allocation1 [shape = 'u32[144,128]{1,0:T(1,128)}', space=vmem, size = 0x12000, scoped, tag = 'internal scratch']
  %s0 = inlined_call_operand.vmem [shape: f32[8,4], index: 0, kind: input, shape index: {}]
  %s1 = inlined_call_operand.vmem [shape: f32[4,128], index: 1, kind: input, shape index: {}]
  %s2 = inlined_call_operand.vmem [shape: f32[1,128], index: 2, kind: input, shape index: {}]
  %s3 = inlined_call_operand.hbm [shape: f32[8,128], index: 3, kind: output, shape index: {}]
  %s4 = sld [smem:[#allocation0]]
  $region22: #{tpu_custom_call.1} parent=0
    _
  %s6 = ssub.s32 1, %s4
  %s7 = scalar_select 0, %s6, %s4
  $region1: #{tpu_custom_call.1} parent=0
    #allocation2 [shape = 'u8[4096]{0}', space=vmem, size = 0x1000, scoped, tag = 'output window, operand 0, single buffered']
    #allocation3 [shape = 's32[1]{0}', space=sflag, size = 0x4, scoped, tag = 'scoped memory for tpu_custom_call.1']
    %8 = vsyncpa [#allocation3], 0
    // Predicated region
    $region2: #{tpu_custom_call.1} parent=1 // pred_check
      _
    $region3: #{tpu_custom_call.1} parent=1 // pred_check_branch
      %10 = sbr.rel (0) target = $region5
    $region4: #{tpu_custom_call.1} parent=1 // pred_region
      _
    $region5: #{tpu_custom_call.1} parent=1 // pred_fallthru
      _
    // Predicated region
    $region6: #{tpu_custom_call.1} parent=1 // pred_check
      _
    $region7: #{tpu_custom_call.1} parent=1 // pred_check_branch
      %12 = sbr.rel (0) target = $region9
    $region8: #{tpu_custom_call.1} parent=1 // pred_region
      _
    $region9: #{tpu_custom_call.1} parent=1 // pred_fallthru
      _
    // Predicated region
    $region10: #{tpu_custom_call.1} parent=1 // pred_check
      _
    $region11: #{tpu_custom_call.1} parent=1 // pred_check_branch
      %14 = sbr.rel (0) target = $region13
    $region12: #{tpu_custom_call.1} parent=1 // pred_region
      _
    $region13: #{tpu_custom_call.1} parent=1 // pred_fallthru
      _
    %v15 = vld [vmem:[%s0] sm:$0xff]
    %v16 = vld [vmem:[%s1] sm:$0x1]
    %18 = vset.pattern.permute.xlu0 0
    %19 = vperm.xlu0 %18, %v15
    %v20 = vpop.permute.xlu0 %19
    %v22 = vlaneseq
    %v23 = vshrl.u32 %v22, 7
    %v24 = vsub.s32 0, %v23
    %v25 = vrot.slane %v16, %v24
    %v26 = vmul.f32 %v20, %v25
    %v27 = vld [vmem:[%s1 + $0x1] sm:$0x1]
    %28 = vset.pattern.permute.xlu0 1
    %29 = vperm.xlu0 %28, %v15
    %v30 = vpop.permute.xlu0 %29
    %v32 = vlaneseq
    %v33 = vshrl.u32 %v32, 7
    %v34 = vsub.s32 0, %v33
    %v35 = vrot.slane %v27, %v34
    %v36 = vmul.f32 %v30, %v35
    %v37 = vadd.f32 %v26, %v36
    %v38 = vld [vmem:[%s1 + $0x2] sm:$0x1]
    %39 = vset.pattern.permute.xlu0 2
    %40 = vperm.xlu0 %39, %v15
    %v41 = vpop.permute.xlu0 %40
    %v43 = vlaneseq
    %v44 = vshrl.u32 %v43, 7
    %v45 = vsub.s32 0, %v44
    %v46 = vrot.slane %v38, %v45
    %v47 = vmul.f32 %v41, %v46
    %v48 = vadd.f32 %v37, %v47
    %v49 = vld [vmem:[%s1 + $0x3] sm:$0x1]
    %50 = vset.pattern.permute.xlu0 3
    %51 = vperm.xlu0 %50, %v15
    %v52 = vpop.permute.xlu0 %51
    %v54 = vlaneseq
    %v55 = vshrl.u32 %v54, 7
    %v56 = vsub.s32 0, %v55
    %v57 = vrot.slane %v49, %v56
    %v58 = vmul.f32 %v52, %v57
    %v59 = vadd.f32 %v48, %v58
    %v60 = vld [vmem:[%s2] sm:$0x1]
    %v62 = vlaneseq
    %v63 = vshrl.u32 %v62, 7
    %v64 = vsub.s32 0, %v63
    %v65 = vrot.slane %v60, %v64
    %v67 = vadd.f32 %v59, %v65
    %v68 = vand.u32 2147483647, %v67
    %vm69 = vcmp.le.f32.partialorder %v68, 0.7853982
    %vm70 = vcmp.lt.s32.totalorder %v67, 0
    %v71 = vand.u32 %v67, 2139095040
    %v72 = vshrl.u32 %v71, 23
    %v73 = vsub.s32 %v72, 127
    %v74 = vand.u32 2147483647, %v67
    %v75 = vand.u32 %v74, 8388607
    %v76 = vor.u32 %v75, 8388608
    %v77 = vsub.s32 0, %v76
    %v78 = vadd.s32 %v73, 1
    %vm79 = vcmp.gt.s32.totalorder %v78, 0
    %v80 = vsel %vm79, %v78, 0
    %v81 = vshrl.u32 %v80, 5
    %v82 = vand.u32 %v80, 31
    %v83 = vsub.s32 32, %v82
    %v84 = vshrl.u32 683565275, %v83
    %v85 = vshll.u32 683565275, %v82
    %v86 = vshrl.u32 2475754826, %v83
    %v87 = vor.u32 %v85, %v86
    %v88 = vshll.u32 2475754826, %v82
    %v89 = vshrl.u32 2131351028, %v83
    %v90 = vor.u32 %v88, %v89
    %v91 = vshll.u32 2131351028, %v82
    %v92 = vshrl.u32 2102212464, %v83
    %v93 = vor.u32 %v91, %v92
    %v94 = vshll.u32 2102212464, %v82
    %v95 = vshrl.u32 920167782, %v83
    %v96 = vor.u32 %v94, %v95
    %v97 = vshll.u32 920167782, %v82
    %v98 = vshrl.u32 1326507024, %v83
    %v99 = vor.u32 %v97, %v98
    %vm100 = vcmp.lt.s32.totalorder %v81, 1
    %vm101 = vcmp.lt.s32.totalorder %v81, 2
    %vm102 = vcmp.lt.s32.totalorder %v81, 3
    %vm103 = vcmp.lt.s32.totalorder %v81, 4
    %v104 = vsel %vm100, %v84, %v87
    %v105 = vsel %vm103, %v93, 2102212464
    %v106 = vsel %vm102, %v90, %v105
    %v107 = vsel %vm101, %v104, %v106
    %v108 = vsel %vm100, %v87, %v90
    %v109 = vsel %vm103, %v96, 920167782
    %v110 = vsel %vm102, %v93, %v109
    %v111 = vsel %vm101, %v108, %v110
    %v112 = vsel %vm100, %v90, %v93
    %v113 = vsel %vm103, %v99, 1326507024
    %v114 = vsel %vm102, %v96, %v113
    %v115 = vsel %vm101, %v112, %v114
    %v116 = vshll.u32 %v76, 8
    %v117 = vmul.u32.u64.compose %v116, %v115
    %v118 = vextract.low.u32 %v117
    %v119 = vextract.high.u32 %v117
    %v120 = vmul.u32.u64.compose %v116, %v111
    %v121 = vextract.low.u32 %v120
    %v122 = vextract.high.u32 %v120
    %v123 = vmul.u32 %v116, %v107
    %v124 = vadd.s32 %v119, %v121
    %vm125 = vc.u32 %v119, %v121
    %v126 = vadd.s32 %v122, 1
    %v127 = vsel %vm125, %v126, %v122
    %v128 = vadd.s32 %v123, %v127
    %v129 = vadd.s32 %v128, 536870912
    %v130 = vshrl.u32 %v129, 30
    %v131 = vshll.u32 %v130, 30
    %v132 = vsub.s32 %v128, %v131
    %vm133 = vcmp.lt.s32.totalorder %v132, 0
    %v134 = vsub.s32 0, %v132
    %v135 = vsel %vm133, %v134, %v132
    %v136 = vclz %v135
    %v137 = vsub.s32 %v136, 2
    %vm138 = vcmp.gt.s32.totalorder 0, %v137
    %v139 = vsel %vm138, 0, %v137
    %v140 = vsub.s32 32, %v139
    %v141 = vshll.u32 %v132, %v139
    %v142 = vshrl.u32 %v124, %v140
    %v143 = vor.u32 %v141, %v142
    %v144 = vsub.s32 4294967266, %v139
    %v145 = vadd.s32 %v144, 127
    %v146 = vshll.u32 %v145, 23
    %v147 = vor.u32 4788187, %v146
    %v148 = vand.u32 2147483647, %v147
    %v150 = vcvt.s32.f32 %v143
    %v151 = vmul.f32 %v150, %v148
    %v152 = vxor.u32 %v151, 2147483648
    %v153 = vsel %vm70, %v152, %v151
    %v154 = vsub.s32 4, %v130
    %v155 = vsel %vm70, %v154, %v130
    %v156 = vsel %vm69, %v67, %v153
    %v157 = vsel %vm69, 0, %v155
    %v158 = vcosq.f32.pop %v156
    %v159 = vsinq.f32.pop %v156
    %vm160 = vweird.f32 %v67
    %v161 = vadd.s32 %v157, 3
    %v162 = vand.u32 %v161, 3
    %vm163 = vcmp.lt.s32.totalorder %v162, 2
    %vm164 = vcmp.eq.s32.totalorder %v162, 0
    %v165 = vxor.u32 %v159, 2147483648
    %v166 = vsel %vm164, %v158, %v165
    %vm167 = vcmp.eq.s32.totalorder %v162, 2
    %v168 = vxor.u32 %v158, 2147483648
    %v169 = vsel %vm167, %v168, %v159
    %v170 = vsel %vm163, %v166, %v169
    %v171 = vsel %vm160, nan, %v170
    %172 = vst [vmem:[#allocation2] sm:$0xff] %v171
    // Predicated region
    $region14: #{tpu_custom_call.1} parent=1 // pred_check
      _
    $region15: #{tpu_custom_call.1} parent=1 // pred_check_branch
      %174 = sbr.rel (0) target = $region17
    $region16: #{tpu_custom_call.1} parent=1 // pred_region
      %s176 = ssub.s32 128, 128
      %177 = vsyncadd [#allocation3], %s176
      %s179 = sshll.u32 [#allocation2], 4
      %s180 = int_to_ptr.vmem [resolvable:$true] %s179
      %182 = dma.vmem_to_hbm [thread:$0]  %s180, 128, %s3, [#allocation3]
    $region17: #{tpu_custom_call.1} parent=1 // pred_fallthru
      _
    // Predicated region
    $region18: #{tpu_custom_call.1} parent=1 // pred_check
      _
    $region19: #{tpu_custom_call.1} parent=1 // pred_check_branch
      %184 = sbr.rel (0) target = $region21
    $region20: #{tpu_custom_call.1} parent=1 // pred_region
      %185 = dma.done [#allocation3], 128
    $region21: #{tpu_custom_call.1} parent=1 // pred_fallthru
      _
    %186 = vsyncpa [#allocation3], 1

</llo_original>
